<compile_context>
chip_gen: v5e
topology: v5e:2x2
jax: 0.10.0
libtpu: 0.0.40
codegen_flags: <defaults>
</compile_context>

<pallas_src>
import functools

import jax
import jax.numpy as jnp
from jax.experimental import pallas as pl
from jax.experimental.pallas import tpu as pltpu


def nnet_kernel(xt_ref, p_ref, o_ref, *, in_size, out_size):
    # xt_ref: (IN, Bp)   input, transposed (batch on lanes), Bp % 128 == 0
    # p_ref : (H, P)     packed params: cols [0:IN]=W1, [IN]=b1,
    #                    [IN+1:IN+1+OUT]=W2.T, [IN+1+OUT]=b2 (rows 0..OUT-1)
    # o_ref : (OUT, Bp)  lane-dense output
    xt = xt_ref[...]                                     # (IN, Bp)
    p = p_ref[...]                                       # (H, P), tiny

    # ---- Layer 1: h = tanh(W1 @ x + b1) as VPU broadcast FMAs (K = IN tiny).
    # The (1, Bp) input row broadcasts over the H sublanes inside the multiply;
    # Mosaic folds the sublane broadcast (cheaper than any MXU pass here).
    acc = p[:, in_size:in_size + 1]                      # b1 column, (H, 1)
    acc = acc + p[:, 0:1] * xt[0:1, :]                   # (H,1)*(1,Bp) -> (H,Bp)
    for i in range(1, in_size):                          # static unroll, IN small
        acc = acc + p[:, i:i + 1] * xt[i:i + 1, :]
    h = jnp.tanh(acc)                                    # (H, Bp), EUP

    # ---- Layer 2: out = sigmoid(W2 @ h + b2) as VPU mul + sublane (XLU) reduce.
    w2_col0 = in_size + 1
    b2_col = in_size + 1 + out_size
    rows = []
    for o in range(out_size):                            # static unroll, OUT small
        r = jnp.sum(p[:, w2_col0 + o:w2_col0 + o + 1] * h, axis=0, keepdims=True)
        rows.append(r + p[o:o + 1, b2_col:b2_col + 1])   # (1, Bp) + (1, 1)
    y = rows[0] if out_size == 1 else jnp.concatenate(rows, axis=0)

    o_ref[...] = jax.nn.sigmoid(y).astype(o_ref.dtype)   # unmasked lane-dense vst


def pack_params(w1, b1, w2, b2):
    """Pack all parameters into one lane-padded (H, 8) f32 slab (built once).

    Column layout: [0:IN]=W1 | [IN]=b1 | [IN+1:IN+1+OUT]=W2.T | [IN+1+OUT]=b2.
    One slab == one HBM->VMEM DMA per forward instead of four tiny ones.
    """
    hidden, in_size = w1.shape
    out_size = w2.shape[0]
    n_cols = max(8, in_size + out_size + 2)
    slab = jnp.zeros((hidden, n_cols), jnp.float32)
    slab = slab.at[:, :in_size].set(w1.astype(jnp.float32))
    slab = slab.at[:, in_size].set(b1.astype(jnp.float32))
    slab = slab.at[:, in_size + 1:in_size + 1 + out_size].set(w2.T.astype(jnp.float32))
    slab = slab.at[:out_size, in_size + 1 + out_size].set(b2.astype(jnp.float32))
    return slab


@functools.partial(jax.jit, static_argnames=("out_size",))
def nnet_forward(x, params, *, out_size):
    """Forward matching torch: sigmoid(tanh(x @ W1.T + b1) @ W2.T + b2).

    x: (B, in) float; params: packed slab from pack_params.  Returns (B, out).
    """
    B, in_size = x.shape
    b_pad = ((B + 127) // 128) * 128                     # fill the 128-lane vreg

    # Transpose fused into the (required) pad producer -> a single tiny fusion,
    # not a standalone transpose op bracketing the ~1 us kernel.
    xt = jnp.zeros((in_size, b_pad), jnp.float32).at[:, :B].set(
        x.T.astype(jnp.float32))

    kernel = functools.partial(nnet_kernel, in_size=in_size, out_size=out_size)
    out_t = pl.pallas_call(
        kernel,
        out_shape=jax.ShapeDtypeStruct((out_size, b_pad), jnp.float32),
        # Whole-array blocks resident in VMEM; no grid -> single invocation,
        # zero per-step pipelining overhead, weights fetched exactly once.
        in_specs=[pl.BlockSpec(memory_space=pltpu.MemorySpace.VMEM),
                  pl.BlockSpec(memory_space=pltpu.MemorySpace.VMEM)],
        out_specs=pl.BlockSpec(memory_space=pltpu.MemorySpace.VMEM),
    )(xt, params)

    if out_size == 1:
        # (1, Bp) -> (B, 1) with a free reshape + slice, no transpose op.
        return out_t.reshape(b_pad)[:B].reshape(B, 1)
    return out_t[:, :B].T                                # general fallback (OUT > 1)


def reference_forward(x, w1, b1, w2, b2):
    h = jnp.tanh(x @ w1.T + b1)
    return jax.nn.sigmoid(h @ w2.T + b2)


if __name__ == "__main__":
    # Shapes implied by the script: in_size=2 (two csv features), small hidden,
    # out_size=1 (binary target).
    B, IN, HID, OUT = 64, 2, 32, 1

    key = jax.random.PRNGKey(0)
    kx, k1, kb1, k2, kb2 = jax.random.split(key, 5)

    x = jax.random.normal(kx, (B, IN), dtype=jnp.float32)

    # Deterministic parameter init in torch Linear layout (W: (out, in)).
    bound1 = 1.0 / (IN ** 0.5)
    w1 = jax.random.uniform(k1, (HID, IN), jnp.float32, -bound1, bound1)
    b1 = jax.random.uniform(kb1, (HID,), jnp.float32, -bound1, bound1)
    bound2 = 1.0 / (HID ** 0.5)
    w2 = jax.random.uniform(k2, (OUT, HID), jnp.float32, -bound2, bound2)
    b2 = jax.random.uniform(kb2, (OUT,), jnp.float32, -bound2, bound2)

    params = pack_params(w1, b1, w2, b2)     # built once at setup

    out = nnet_forward(x, params, out_size=OUT)
    out = jax.block_until_ready(out)

    ref = reference_forward(x, w1, b1, w2, b2)
    assert out.shape == (B, OUT)
    assert jnp.allclose(out, ref, atol=1e-5, rtol=1e-5), "mismatch vs reference"

    print("KERNEL_OK")
</pallas_src>

<mosaic_0001>
module attributes {stable_mosaic.version = 11 : i64} {
  func.func @nnet_kernel(%arg0: memref<2x128xf32, #tpu.memory_space<vmem>>, %arg1: memref<32x8xf32, #tpu.memory_space<vmem>>, %arg2: memref<1x128xf32, #tpu.memory_space<vmem>>) attributes {dimension_semantics = [], scalar_prefetch = 0 : i64, scratch_operands = 0 : i64, tpu.core_type = #tpu.core_type<tc>} {
    %c0 = arith.constant 0 : index
    %c0_0 = arith.constant 0 : index
    %0 = vector.load %arg0[%c0, %c0_0] : memref<2x128xf32, #tpu.memory_space<vmem>>, vector<2x128xf32>
    %c0_1 = arith.constant 0 : index
    %c0_2 = arith.constant 0 : index
    %1 = vector.load %arg1[%c0_1, %c0_2] : memref<32x8xf32, #tpu.memory_space<vmem>>, vector<32x8xf32>
    %2 = vector.extract_strided_slice %1 {offsets = [0, 2], sizes = [32, 1], strides = [1, 1]} : vector<32x8xf32> to vector<32x1xf32>
    %3 = vector.extract_strided_slice %1 {offsets = [0, 0], sizes = [32, 1], strides = [1, 1]} : vector<32x8xf32> to vector<32x1xf32>
    %4 = vector.extract_strided_slice %0 {offsets = [0, 0], sizes = [1, 128], strides = [1, 1]} : vector<2x128xf32> to vector<1x128xf32>
    %5 = vector.broadcast %3 : vector<32x1xf32> to vector<32x128xf32>
    %6 = vector.broadcast %4 : vector<1x128xf32> to vector<32x128xf32>
    %7 = arith.mulf %5, %6 : vector<32x128xf32>
    %8 = vector.broadcast %2 : vector<32x1xf32> to vector<32x128xf32>
    %9 = arith.addf %8, %7 : vector<32x128xf32>
    %10 = vector.extract_strided_slice %1 {offsets = [0, 1], sizes = [32, 1], strides = [1, 1]} : vector<32x8xf32> to vector<32x1xf32>
    %11 = vector.extract_strided_slice %0 {offsets = [1, 0], sizes = [1, 128], strides = [1, 1]} : vector<2x128xf32> to vector<1x128xf32>
    %12 = vector.broadcast %10 : vector<32x1xf32> to vector<32x128xf32>
    %13 = vector.broadcast %11 : vector<1x128xf32> to vector<32x128xf32>
    %14 = arith.mulf %12, %13 : vector<32x128xf32>
    %15 = arith.addf %9, %14 : vector<32x128xf32>
    %16 = math.tanh %15 : vector<32x128xf32>
    %17 = vector.extract_strided_slice %1 {offsets = [0, 3], sizes = [32, 1], strides = [1, 1]} : vector<32x8xf32> to vector<32x1xf32>
    %18 = vector.broadcast %17 : vector<32x1xf32> to vector<32x128xf32>
    %19 = arith.mulf %18, %16 : vector<32x128xf32>
    %cst = arith.constant dense<0.000000e+00> : vector<128xf32>
    %20 = vector.multi_reduction <add>, %19, %cst [0] : vector<32x128xf32> to vector<128xf32>
    %21 = vector.shape_cast %20 : vector<128xf32> to vector<1x128xf32>
    %22 = vector.extract_strided_slice %1 {offsets = [0, 4], sizes = [1, 1], strides = [1, 1]} : vector<32x8xf32> to vector<1x1xf32>
    %23 = vector.broadcast %22 : vector<1x1xf32> to vector<1x128xf32>
    %24 = arith.addf %21, %23 : vector<1x128xf32>
    %25 = arith.negf %24 : vector<1x128xf32>
    %26 = math.exp %25 : vector<1x128xf32>
    %cst_3 = arith.constant 1.000000e+00 : f32
    %27 = vector.broadcast %cst_3 : f32 to vector<1x128xf32>
    %28 = arith.addf %27, %26 : vector<1x128xf32>
    %29 = arith.divf %27, %28 : vector<1x128xf32>
    %c0_4 = arith.constant 0 : index
    %c0_5 = arith.constant 0 : index
    %30 = vector.load %arg2[%c0_4, %c0_5] : memref<1x128xf32, #tpu.memory_space<vmem>>, vector<1x128xf32>
    tpu.vector_store %arg2[%c0_4, %c0_5], %29 {strides = array<i32>} : memref<1x128xf32, #tpu.memory_space<vmem>>, vector<1x128xf32>,
    return
  }
}

</mosaic_0001>

<llo_original>
// kernel: nnet_forward.1
$region0: #{nnet_forward.1}
  #allocation0 [shape = 'u32[]', space=smem, size = 0x4, offset = 0x4, fixed_abs, tag = 'smem constant byte address 0x4 - core index']
  #allocation1 [shape = 'u32[72,128]{1,0:T(1,128)}', space=vmem, size = 0x9000, scoped, tag = 'internal scratch']
  %s0 = inlined_call_operand.vmem [shape: f32[2,128], index: 0, kind: input, shape index: {}]
  %s1 = inlined_call_operand.vmem [shape: f32[32,8], index: 1, kind: input, shape index: {}]
  %s2 = inlined_call_operand.vmem [shape: f32[1,128], index: 2, kind: output, shape index: {}]
  %s3 = sld [smem:[#allocation0]]
  $region18: #{nnet_forward.1} parent=0
    _
  %s5 = ssub.s32 1, %s3
  %s6 = scalar_select 0, %s5, %s3
  // Predicated region
  $region2: #{nnet_forward.1} parent=0 // pred_check
    _
  $region3: #{nnet_forward.1} parent=0 // pred_check_branch
    %8 = sbr.rel (0) target = $region5
  $region4: #{nnet_forward.1} parent=0 // pred_region
    _
  $region5: #{nnet_forward.1} parent=0 // pred_fallthru
    _
  // Predicated region
  $region6: #{nnet_forward.1} parent=0 // pred_check
    _
  $region7: #{nnet_forward.1} parent=0 // pred_check_branch
    %10 = sbr.rel (0) target = $region9
  $region8: #{nnet_forward.1} parent=0 // pred_region
    _
  $region9: #{nnet_forward.1} parent=0 // pred_fallthru
    _
  %v11 = vld [vmem:[%s0] sm:$0x3]
  %v12 = vld [vmem:[%s1] sm:$0xff]
  %v13 = vld [vmem:[%s1 + $0x8] sm:$0xff]
  %v14 = vld [vmem:[%s1 + $0x10] sm:$0xff]
  %v15 = vld [vmem:[%s1 + $0x18] sm:$0xff]
  %17 = vset.pattern.permute.xlu0 0
  %18 = vperm.xlu0 %17, %v12
  %v19 = vpop.permute.xlu0 %18
  %22 = vset.pattern.permute.xlu0 0
  %23 = vperm.xlu0 %22, %v13
  %v24 = vpop.permute.xlu0 %23
  %27 = vset.pattern.permute.xlu0 0
  %28 = vperm.xlu0 %27, %v14
  %v29 = vpop.permute.xlu0 %28
  %32 = vset.pattern.permute.xlu0 0
  %33 = vperm.xlu0 %32, %v15
  %v34 = vpop.permute.xlu0 %33
  %v36 = vperm.slane %v11, 0
  %v37 = vmul.f32 %v19, %v36
  %v38 = vmul.f32 %v24, %v36
  %v39 = vmul.f32 %v29, %v36
  %v40 = vmul.f32 %v34, %v36
  %41 = vset.pattern.permute.xlu0 2
  %42 = vperm.xlu0 %41, %v12
  %v43 = vpop.permute.xlu0 %42
  %45 = vset.pattern.permute.xlu0 2
  %46 = vperm.xlu0 %45, %v13
  %v47 = vpop.permute.xlu0 %46
  %49 = vset.pattern.permute.xlu0 2
  %50 = vperm.xlu0 %49, %v14
  %v51 = vpop.permute.xlu0 %50
  %53 = vset.pattern.permute.xlu0 2
  %54 = vperm.xlu0 %53, %v15
  %v55 = vpop.permute.xlu0 %54
  %v57 = vadd.f32 %v43, %v37
  %v58 = vadd.f32 %v47, %v38
  %v59 = vadd.f32 %v51, %v39
  %v60 = vadd.f32 %v55, %v40
  %61 = vset.pattern.permute.xlu0 1
  %62 = vperm.xlu0 %61, %v12
  %v63 = vpop.permute.xlu0 %62
  %65 = vset.pattern.permute.xlu0 1
  %66 = vperm.xlu0 %65, %v13
  %v67 = vpop.permute.xlu0 %66
  %69 = vset.pattern.permute.xlu0 1
  %70 = vperm.xlu0 %69, %v14
  %v71 = vpop.permute.xlu0 %70
  %73 = vset.pattern.permute.xlu0 1
  %74 = vperm.xlu0 %73, %v15
  %v75 = vpop.permute.xlu0 %74
  %v77 = vperm.slane %v11, 1
  %v78 = vmul.f32 %v63, %v77
  %v79 = vmul.f32 %v67, %v77
  %v80 = vmul.f32 %v71, %v77
  %v81 = vmul.f32 %v75, %v77
  %v82 = vadd.f32 %v57, %v78
  %v83 = vadd.f32 %v58, %v79
  %v84 = vadd.f32 %v59, %v80
  %v85 = vadd.f32 %v60, %v81
  %v86 = vtanh.pop %v82
  %v87 = vtanh.pop %v83
  %v88 = vtanh.pop %v84
  %v89 = vtanh.pop %v85
  %90 = vset.pattern.permute.xlu0 3
  %91 = vperm.xlu0 %90, %v12
  %v92 = vpop.permute.xlu0 %91
  %94 = vset.pattern.permute.xlu0 3
  %95 = vperm.xlu0 %94, %v13
  %v96 = vpop.permute.xlu0 %95
  %98 = vset.pattern.permute.xlu0 3
  %99 = vperm.xlu0 %98, %v14
  %v100 = vpop.permute.xlu0 %99
  %102 = vset.pattern.permute.xlu0 3
  %103 = vperm.xlu0 %102, %v15
  %v104 = vpop.permute.xlu0 %103
  %v106 = vmul.f32 %v92, %v86
  %v107 = vmul.f32 %v96, %v87
  %v108 = vmul.f32 %v100, %v88
  %v109 = vmul.f32 %v104, %v89
  %v110 = vadd.f32 %v106, %v107
  %v111 = vadd.f32 %v110, %v108
  %v112 = vadd.f32 %v111, %v109
  %v113 = vrot.slane %v112, 4
  %v114 = vadd.f32 %v112, %v113
  %v115 = vrot.slane %v114, 2
  %v116 = vadd.f32 %v114, %v115
  %v117 = vrot.slane %v116, 1
  %v118 = vadd.f32 %v116, %v117
  %119 = vset.pattern.permute.xlu0 4
  %120 = vperm.xlu0 %119, %v12
  %v121 = vpop.permute.xlu0 %120
  %v123 = vadd.f32 %v118, %v121
  %v124 = vxor.u32 %v123, 2147483648
  %v125 = vmul.f32 %v124, 1.442695
  %v126 = vpow.pop %v125
  %v127 = vadd.f32 %v126, 1.0
  %v128 = vrcp.pop %v127
  %v129 = vmul.f32 %v127, %v128
  %v130 = vsub.f32 1.0, %v129
  %v131 = vmul.f32 %v128, %v130
  %v132 = vadd.f32 %v128, %v131
  %vm133 = vweird.f32 %v127
  %vm134 = vweird.f32 %v128
  %vm135 = vmor %vm133, %vm134
  %v136 = vsel %vm135, %v128, %v132
  %v137 = vand.u32 2147483647, %v127
  %vm138 = vcmp.eq.f32.partialorder %v137, 8.507059e+37
  %v139 = vand.u32 %v127, 2147483648
  %v140 = vor.u32 1.1754944e-38, %v139
  %v141 = vsel %vm138, %v140, %v136
  %v142 = vmul.f32 1.0, %v141
  %143 = vst [vmem:[%s2] sm:$0x1] %v142
  // Predicated region
  $region10: #{nnet_forward.1} parent=0 // pred_check
    _
  $region11: #{nnet_forward.1} parent=0 // pred_check_branch
    %145 = sbr.rel (0) target = $region13
  $region12: #{nnet_forward.1} parent=0 // pred_region
    _
  $region13: #{nnet_forward.1} parent=0 // pred_fallthru
    _
  // Predicated region
  $region14: #{nnet_forward.1} parent=0 // pred_check
    _
  $region15: #{nnet_forward.1} parent=0 // pred_check_branch
    %147 = sbr.rel (0) target = $region17
  $region16: #{nnet_forward.1} parent=0 // pred_region
    _
  $region17: #{nnet_forward.1} parent=0 // pred_fallthru
    _

</llo_original>
